<compile_context>
chip_gen: v7x
topology: tpu7x:2x2x1
jax: 0.10.0
libtpu: 0.0.40
codegen_flags: <defaults>
</compile_context>

<pallas_src>
import functools

import numpy as np
import jax
import jax.numpy as jnp
from jax.experimental import pallas as pl
from jax.experimental.pallas import tpu as pltpu


def _round_up(n, m):
    return ((n + m - 1) // m) * m


# ----------------------------------------------------------------------------
# Shape-only constants (built once per shape, folded at trace time).
# ----------------------------------------------------------------------------
@functools.lru_cache(maxsize=None)
def _box_crop_matrix(Hp, Wp, K, Ho, Wo, PP):
    """0/1 matrix: (padded Hp*Wp, zero-padded to PP) x (Ho*Wo).

    Column (y, x) has ones at the K*K padded positions (y+di)*Wp + (x+dj), so
    prod @ T == KxK box-sum + crop to the (Ho, Wo) output grid.  Rows >= Hp*Wp
    (lane padding) stay zero.
    """
    t = np.zeros((PP, Ho * Wo), np.float32)
    for y in range(Ho):
        for x in range(Wo):
            col = y * Wo + x
            for di in range(K):
                for dj in range(K):
                    t[(y + di) * Wp + (x + dj), col] = 1.0
    return t


@functools.lru_cache(maxsize=None)
def _mean_selectors(B, C_g, C_in, Kg, R, GR, HW):
    """Constant selector matrices for the guidance-mean / kcc build.

    esel:  (B*C_g*C_in, GR) with 1/HW at the CENTER-tap im2col row of each
           (b, cg); the center tap always covers the raw HxW region for any
           padding >= 0, so its lane sum equals the raw channel sum.
    kmask: (B*C_g*C_in, B*C_in) 0/1: 1 iff same batch and same in-channel.
    """
    taps = Kg * Kg
    center = (Kg // 2) * Kg + (Kg // 2)
    n = B * C_g * C_in
    esel = np.zeros((n, GR), np.float32)
    kmask = np.zeros((n, B * C_in), np.float32)
    for b in range(B):
        for cg in range(C_g):
            for i in range(C_in):
                r = (b * C_g + cg) * C_in + i
                esel[r, b * R + cg * taps + center] = 1.0 / HW
                kmask[r, b * C_in + i] = 1.0
    return esel, kmask


# ----------------------------------------------------------------------------
# Fused kernel: guided convolution (steps 1-5) + BatchNorm2d (step 6).
# ----------------------------------------------------------------------------
def _guided_conv_bn_kernel(
    d_ref,   # (GR + B*C_in, PP) f32: [guidance im2col ; ones row ; pad ; padded data]
    t_ref,   # (PP, HWo)         bf16: 0/1 box-sum + crop matrix
    p_ref,   # (PR, GR)          f32: packed parameters / selectors
    o_ref,   # (B*C_out, HWo)    f32: output (reshaped to NCHW in the wrapper)
    *, n_grows, bci, bco, nk, c_out, b_sz, hw_out,
    r_esel, r_km, r_wm, r_bcc, r_gb, leakage, eps,
):
    f32 = jnp.float32

    # ---- loads (all static, sublane offsets are multiples of 8) -------------
    g = d_ref[0:n_grows, :]                       # (GR, PP)  im2col + ones row
    x = d_ref[n_grows:n_grows + bci, :]           # (B*C_in, PP) padded data

    w_aug = p_ref[0:bci, :]                       # (B*C_in, GR) block-diag conv w | bias
    esel = p_ref[r_esel:r_esel + nk, :]           # (NK, GR)  mean selector (1/HW)
    kmask = p_ref[r_km:r_km + nk, 0:bci]          # (NK, B*C_in)
    wmat = p_ref[r_wm:r_wm + bco, 0:nk]           # (B*C_out, NK) block-diag Linear w
    bcc = p_ref[r_bcc:r_bcc + bco, 0:bci]         # (B*C_out, B*C_in) block-diag Linear b
    gamma = p_ref[r_gb:r_gb + c_out, 0:1]         # (C_out, 1)
    beta = p_ref[r_gb:r_gb + c_out, 1:2]          # (C_out, 1)

    # ---- step 1: spatially-varying channel-wise kernel (ONE matmul) ---------
    # bias is folded in via the ones-row of g.
    kgl = jnp.dot(w_aug, g, preferred_element_type=f32)          # (B*C_in, PP)

    # ---- step 2a: guided elementwise product ---------------------------------
    prod = x * kgl                                               # (B*C_in, PP)

    # ---- step 3: per-(batch, guidance-channel) means, vectorized ------------
    # One selector matmul (picks the center-tap im2col rows, pre-scaled by
    # 1/HW) + one lane reduction; no per-channel loop, no single-row slices.
    gsel = jnp.dot(esel, g, preferred_element_type=f32)          # (NK, PP)
    mexp = jnp.sum(gsel, axis=1, keepdims=True)                  # (NK, 1)

    # ---- step 4a: block-diagonal cross-channel 1x1 kernel --------------------
    kcc = jnp.dot(wmat, mexp * kmask, preferred_element_type=f32) + bcc  # (B*C_out, B*C_in)

    # ---- step 2b: KxK box-sum + crop as ONE matmul against the 0/1 matrix ----
    x1 = jnp.dot(prod, t_ref[...].astype(f32),
                 preferred_element_type=f32)                     # (B*C_in, HWo)

    # ---- step 4b: cross-channel 1x1 conv on the lane-dense slab --------------
    x2 = jnp.dot(kcc, x1, preferred_element_type=f32)            # (B*C_out, HWo)

    # ---- step 5: LeakyReLU ----------------------------------------------------
    x3 = jnp.where(x2 > 0, x2, leakage * x2)

    # ---- step 6: BatchNorm2d, training mode, single pass ---------------------
    inv_n = 1.0 / float(b_sz * hw_out)
    parts = [x3[b * c_out:(b + 1) * c_out, :] for b in range(b_sz)]
    tot = parts[0]
    tot2 = parts[0] * parts[0]
    for b in range(1, b_sz):
        tot = tot + parts[b]
        tot2 = tot2 + parts[b] * parts[b]
    mean = jnp.sum(tot, axis=1, keepdims=True) * inv_n           # (C_out, 1)
    var = jnp.sum(tot2, axis=1, keepdims=True) * inv_n - mean * mean
    scale = gamma * jax.lax.rsqrt(var + eps)
    shift = beta - mean * scale
    for b in range(b_sz):  # unmasked lane-dense stores, sublane offsets % 8 == 0
        o_ref[b * c_out:(b + 1) * c_out, :] = (parts[b] * scale + shift).astype(o_ref.dtype)


# ----------------------------------------------------------------------------
# Wrapper: layout prep (padding, im2col, parameter packing) + one pallas_call.
# Intended to be called under jax.jit so the prep fuses with the kernel launch.
# ----------------------------------------------------------------------------
def guided_convolution(
    data, guidance, w_cw, b_cw, w_cc, b_cc, gamma, beta,
    *, kernel_size=3, padding=1, kgl_kernel_size=3, leakage=0.2, eps=1e-5,
):
    B, C_in, H, W = data.shape
    _, C_g, _, _ = guidance.shape
    C_out = gamma.shape[0]
    K, Kg, pad = kernel_size, kgl_kernel_size, padding
    assert Kg % 2 == 1, "kgl_kernel_size must be odd"
    assert pad >= 0
    pad_kgl = pad + Kg // 2
    Hp, Wp = H + 2 * pad, W + 2 * pad
    Ho, Wo = Hp - K + 1, Wp - K + 1          # output spatial size
    HW, HWo = H * W, Ho * Wo
    taps = Kg * Kg
    R = C_g * taps
    P = Hp * Wp
    PP = _round_up(P, 128)                   # lane-padded flattened padded image
    GR = _round_up(B * R + 1, 8)             # im2col rows + ones row, sublane-padded
    BCI, BCO, NK = B * C_in, B * C_out, B * C_g * C_in
    assert GR >= max(NK, BCI, 2)

    f32 = jnp.float32

    # ---- data slab: [im2col(padded guidance) ; ones row ; pad ; padded data] -
    g_pad = jnp.pad(guidance.astype(f32),
                    ((0, 0), (0, 0), (pad_kgl, pad_kgl), (pad_kgl, pad_kgl)))
    slabs = [g_pad[:, :, di:di + Hp, dj:dj + Wp]
             for di in range(Kg) for dj in range(Kg)]
    g_rows = jnp.stack(slabs, axis=2).reshape(B * R, P)          # (B*R, P)
    g_rows = jnp.concatenate([g_rows, jnp.ones((1, P), f32)], axis=0)
    g_rows = jnp.pad(g_rows, ((0, GR - (B * R + 1)), (0, PP - P)))

    x_rows = jnp.pad(data.astype(f32),
                     ((0, 0), (0, 0), (pad, pad), (pad, pad))).reshape(BCI, P)
    x_rows = jnp.pad(x_rows, ((0, 0), (0, PP - P)))

    d_all = jnp.concatenate([g_rows, x_rows], axis=0)            # (GR + B*C_in, PP)

    # ---- constant box-sum + crop matrix (bf16: 0/1 is exact) -----------------
    t_mat = jnp.asarray(_box_crop_matrix(Hp, Wp, K, Ho, Wo, PP), jnp.bfloat16)

    # ---- packed parameter slab -----------------------------------------------
    r_wcw = 0
    r_esel = r_wcw + _round_up(BCI, 8)
    r_km = r_esel + _round_up(NK, 8)
    r_wm = r_km + _round_up(NK, 8)
    r_bcc = r_wm + _round_up(BCO, 8)
    r_gb = r_bcc + _round_up(BCO, 8)
    PR = r_gb + _round_up(C_out, 8)

    esel_np, kmask_np = _mean_selectors(B, C_g, C_in, Kg, R, GR, HW)

    # block-diag channel-wise conv weight, bias folded into the ones-row column
    w_flat = w_cw.reshape(C_in, R).astype(f32)
    w_aug = jnp.zeros((BCI, GR), f32)
    for b in range(B):
        w_aug = w_aug.at[b * C_in:(b + 1) * C_in, b * R:(b + 1) * R].set(w_flat)
    w_aug = w_aug.at[:, B * R].set(jnp.tile(b_cw.astype(f32), B))

    # block-diag cross-channel Linear weight / bias (matches .view(-1,C_out,C_in,1,1))
    blk = (w_cc.reshape(C_out, C_in, C_g).transpose(0, 2, 1)
           .reshape(C_out, C_g * C_in).astype(f32))
    bcc2 = b_cc.reshape(C_out, C_in).astype(f32)
    wmat = jnp.zeros((BCO, NK), f32)
    bccm = jnp.zeros((BCO, BCI), f32)
    for b in range(B):
        wmat = wmat.at[b * C_out:(b + 1) * C_out,
                       b * C_g * C_in:(b + 1) * C_g * C_in].set(blk)
        bccm = bccm.at[b * C_out:(b + 1) * C_out,
                       b * C_in:(b + 1) * C_in].set(bcc2)

    pk = jnp.zeros((PR, GR), f32)
    pk = pk.at[r_wcw:r_wcw + BCI, :].set(w_aug)
    pk = pk.at[r_esel:r_esel + NK, :].set(jnp.asarray(esel_np))
    pk = pk.at[r_km:r_km + NK, :BCI].set(jnp.asarray(kmask_np))
    pk = pk.at[r_wm:r_wm + BCO, :NK].set(wmat)
    pk = pk.at[r_bcc:r_bcc + BCO, :BCI].set(bccm)
    pk = pk.at[r_gb:r_gb + C_out, 0].set(gamma.astype(f32))
    pk = pk.at[r_gb:r_gb + C_out, 1].set(beta.astype(f32))

    kernel = functools.partial(
        _guided_conv_bn_kernel,
        n_grows=GR, bci=BCI, bco=BCO, nk=NK, c_out=C_out, b_sz=B, hw_out=HWo,
        r_esel=r_esel, r_km=r_km, r_wm=r_wm, r_bcc=r_bcc, r_gb=r_gb,
        leakage=leakage, eps=eps,
    )

    out_flat = pl.pallas_call(
        kernel,
        out_shape=jax.ShapeDtypeStruct((BCO, HWo), f32),
        grid=(1,),
        in_specs=[
            pl.BlockSpec((GR + BCI, PP), lambda i: (0, 0)),   # guidance+data slab
            pl.BlockSpec((PP, HWo), lambda i: (0, 0)),        # box-sum matrix (bf16)
            pl.BlockSpec((PR, GR), lambda i: (0, 0)),         # packed parameters
        ],
        out_specs=pl.BlockSpec((BCO, HWo), lambda i: (0, 0)),
        compiler_params=pltpu.CompilerParams(
            dimension_semantics=("arbitrary",)),
    )(d_all, t_mat, pk)

    return out_flat.reshape(B, C_out, Ho, Wo)


# ----------------------------------------------------------------------------
# Pure-JAX reference (mirrors the PyTorch forward) for a correctness check.
# ----------------------------------------------------------------------------
def _reference(data, guidance, w_cw, b_cw, w_cc, b_cc, gamma, beta,
               *, kernel_size=3, padding=1, kgl_kernel_size=3, leakage=0.2, eps=1e-5):
    B, C_in, H, W = data.shape
    C_out = gamma.shape[0]
    K = kernel_size
    pad_kgl = padding + kgl_kernel_size // 2

    kgl = jax.lax.conv_general_dilated(
        guidance, w_cw, (1, 1), [(pad_kgl, pad_kgl)] * 2,
        dimension_numbers=("NCHW", "OIHW", "NCHW"),
    ) + b_cw[None, :, None, None]

    x_pad = jnp.pad(data, ((0, 0), (0, 0), (padding, padding), (padding, padding)))
    prod = x_pad * kgl
    ones = jnp.ones((C_in, 1, K, K), jnp.float32)
    x1 = jax.lax.conv_general_dilated(
        prod, ones, (1, 1), "VALID",
        dimension_numbers=("NCHW", "OIHW", "NCHW"), feature_group_count=C_in,
    )

    mean_int = jnp.mean(guidance, axis=(2, 3))                  # (B, C_g)
    kcc = (mean_int @ w_cc.T + b_cc).reshape(B, C_out, C_in)
    x2 = jnp.einsum("boc,bchw->bohw", kcc, x1)
    x3 = jnp.where(x2 > 0, x2, leakage * x2)

    m = jnp.mean(x3, axis=(0, 2, 3), keepdims=True)
    v = jnp.mean((x3 - m) ** 2, axis=(0, 2, 3), keepdims=True)
    return gamma[None, :, None, None] * (x3 - m) * jax.lax.rsqrt(v + eps) \
        + beta[None, :, None, None]


if __name__ == "__main__":
    # small shapes consistent with the module's forward
    B, C_in, C_out, C_g, H, W = 2, 4, 8, 4, 16, 16
    Kg = 3

    key = jax.random.PRNGKey(0)
    ks = jax.random.split(key, 8)
    data = jax.random.normal(ks[0], (B, C_in, H, W), jnp.float32)
    guidance = jax.random.normal(ks[1], (B, C_g, H, W), jnp.float32)

    # deterministic synthetic parameters (shapes from __init__)
    w_cw = 0.1 * jax.random.normal(ks[2], (C_in, C_g, Kg, Kg), jnp.float32)   # kgl_channelwise.weight
    b_cw = 0.1 * jax.random.normal(ks[3], (C_in,), jnp.float32)               # kgl_channelwise.bias
    w_cc = 0.1 * jax.random.normal(ks[4], (C_in * C_out, C_g), jnp.float32)   # kgl_crosschannel.weight
    b_cc = 0.1 * jax.random.normal(ks[5], (C_in * C_out,), jnp.float32)       # kgl_crosschannel.bias
    gamma = 1.0 + 0.1 * jax.random.normal(ks[6], (C_out,), jnp.float32)       # BatchNorm2d.weight
    beta = 0.1 * jax.random.normal(ks[7], (C_out,), jnp.float32)              # BatchNorm2d.bias

    fwd = jax.jit(guided_convolution)   # fuses layout prep + kernel launch
    out = jax.block_until_ready(fwd(data, guidance, w_cw, b_cw, w_cc, b_cc,
                                    gamma, beta))

    ref = _reference(data, guidance, w_cw, b_cw, w_cc, b_cc, gamma, beta)
    assert out.shape == (B, C_out, H, W)
    err = float(jnp.max(jnp.abs(out - ref)))
    assert err < 1e-3, f"max abs error vs reference: {err}"
    print("KERNEL_OK")
</pallas_src>

<mosaic_0001>
module attributes {stable_mosaic.version = 11 : i64} {
  func.func @_guided_conv_bn_kernel(%arg0: i32, %arg1: memref<88x384xf32, #tpu.memory_space<vmem>>, %arg2: memref<384x256xbf16, #tpu.memory_space<vmem>>, %arg3: memref<112x80xf32, #tpu.memory_space<vmem>>, %arg4: memref<16x256xf32, #tpu.memory_space<vmem>>) attributes {dimension_semantics = [#tpu.dimension_semantics<arbitrary>], iteration_bounds = array<i64: 1>, scalar_prefetch = 0 : i64, scratch_operands = 0 : i64, tpu.core_type = #tpu.core_type<tc>, window_params = [{pipeline_mode = #tpu.pipeline_mode<synchronous>, transform_indices = @transform_0, window_bounds = array<i64: 88, 384>}, {pipeline_mode = #tpu.pipeline_mode<synchronous>, transform_indices = @transform_1, window_bounds = array<i64: 384, 256>}, {pipeline_mode = #tpu.pipeline_mode<synchronous>, transform_indices = @transform_2, window_bounds = array<i64: 112, 80>}, {pipeline_mode = #tpu.pipeline_mode<synchronous>, transform_indices = @transform_3, window_bounds = array<i64: 16, 256>}]} {
    %c0 = arith.constant 0 : index
    %c0_0 = arith.constant 0 : index
    %0 = vector.load %arg1[%c0, %c0_0] : memref<88x384xf32, #tpu.memory_space<vmem>>, vector<80x384xf32>
    %c80 = arith.constant 80 : index
    %c0_1 = arith.constant 0 : index
    %1 = vector.load %arg1[%c80, %c0_1] : memref<88x384xf32, #tpu.memory_space<vmem>>, vector<8x384xf32>
    %c0_2 = arith.constant 0 : index
    %c0_3 = arith.constant 0 : index
    %2 = vector.load %arg3[%c0_2, %c0_3] : memref<112x80xf32, #tpu.memory_space<vmem>>, vector<8x80xf32>
    %c8 = arith.constant 8 : index
    %c0_4 = arith.constant 0 : index
    %3 = vector.load %arg3[%c8, %c0_4] : memref<112x80xf32, #tpu.memory_space<vmem>>, vector<32x80xf32>
    %c40 = arith.constant 40 : index
    %c0_5 = arith.constant 0 : index
    %4 = vector.load %arg3[%c40, %c0_5] : memref<112x80xf32, #tpu.memory_space<vmem>>, vector<32x8xf32>
    %c72 = arith.constant 72 : index
    %c0_6 = arith.constant 0 : index
    %5 = vector.load %arg3[%c72, %c0_6] : memref<112x80xf32, #tpu.memory_space<vmem>>, vector<16x32xf32>
    %c88 = arith.constant 88 : index
    %c0_7 = arith.constant 0 : index
    %6 = vector.load %arg3[%c88, %c0_7] : memref<112x80xf32, #tpu.memory_space<vmem>>, vector<16x8xf32>
    %c104 = arith.constant 104 : index
    %c0_8 = arith.constant 0 : index
    %7 = vector.load %arg3[%c104, %c0_8] : memref<112x80xf32, #tpu.memory_space<vmem>>, vector<8x1xf32>
    %c104_9 = arith.constant 104 : index
    %c1 = arith.constant 1 : index
    %8 = vector.load %arg3[%c104_9, %c1] : memref<112x80xf32, #tpu.memory_space<vmem>>, vector<8x1xf32>
    %cst = arith.constant dense<0.000000e+00> : vector<8x384xf32>
    %9 = tpu.matmul %2, %0, %cst {dimension_numbers = #tpu.dot_dimension_numbers<[1], [0], [0], [1], [0, 0, 1, 1], [], []>} : vector<8x80xf32>, vector<80x384xf32>, vector<8x384xf32> -> vector<8x384xf32>
    %10 = arith.mulf %1, %9 : vector<8x384xf32>
    %cst_10 = arith.constant dense<0.000000e+00> : vector<32x384xf32>
    %11 = tpu.matmul %3, %0, %cst_10 {dimension_numbers = #tpu.dot_dimension_numbers<[1], [0], [0], [1], [0, 0, 1, 1], [], []>} : vector<32x80xf32>, vector<80x384xf32>, vector<32x384xf32> -> vector<32x384xf32>
    %cst_11 = arith.constant dense<0.000000e+00> : vector<32xf32>
    %12 = vector.multi_reduction <add>, %11, %cst_11 [1] : vector<32x384xf32> to vector<32xf32>
    %13 = vector.shape_cast %12 : vector<32xf32> to vector<32x1xf32>
    %14 = vector.broadcast %13 : vector<32x1xf32> to vector<32x8xf32>
    %15 = arith.mulf %14, %4 : vector<32x8xf32>
    %cst_12 = arith.constant dense<0.000000e+00> : vector<16x8xf32>
    %16 = tpu.matmul %5, %15, %cst_12 {dimension_numbers = #tpu.dot_dimension_numbers<[1], [0], [0], [1], [0, 0, 1, 1], [], []>} : vector<16x32xf32>, vector<32x8xf32>, vector<16x8xf32> -> vector<16x8xf32>
    %17 = arith.addf %16, %6 : vector<16x8xf32>
    %c0_13 = arith.constant 0 : index
    %c0_14 = arith.constant 0 : index
    %18 = vector.load %arg2[%c0_13, %c0_14] : memref<384x256xbf16, #tpu.memory_space<vmem>>, vector<384x256xbf16>
    %19 = arith.extf %18 : vector<384x256xbf16> to vector<384x256xf32>
    %cst_15 = arith.constant dense<0.000000e+00> : vector<8x256xf32>
    %20 = tpu.matmul %10, %19, %cst_15 {dimension_numbers = #tpu.dot_dimension_numbers<[1], [0], [0], [1], [0, 0, 1, 1], [], []>} : vector<8x384xf32>, vector<384x256xf32>, vector<8x256xf32> -> vector<8x256xf32>
    %cst_16 = arith.constant dense<0.000000e+00> : vector<16x256xf32>
    %21 = tpu.matmul %17, %20, %cst_16 {dimension_numbers = #tpu.dot_dimension_numbers<[1], [0], [0], [1], [0, 0, 1, 1], [], []>} : vector<16x8xf32>, vector<8x256xf32>, vector<16x256xf32> -> vector<16x256xf32>
    %cst_17 = arith.constant 0.000000e+00 : f32
    %22 = vector.broadcast %cst_17 : f32 to vector<16x256xf32>
    %23 = arith.cmpf ogt, %21, %22 : vector<16x256xf32>
    %cst_18 = arith.constant 2.000000e-01 : f32
    %24 = vector.broadcast %cst_18 : f32 to vector<16x256xf32>
    %25 = arith.mulf %24, %21 : vector<16x256xf32>
    %26 = arith.select %23, %21, %25 : vector<16x256xi1>, vector<16x256xf32>
    %27 = vector.extract_strided_slice %26 {offsets = [0, 0], sizes = [8, 256], strides = [1, 1]} : vector<16x256xf32> to vector<8x256xf32>
    %28 = vector.extract_strided_slice %26 {offsets = [8, 0], sizes = [8, 256], strides = [1, 1]} : vector<16x256xf32> to vector<8x256xf32>
    %29 = arith.mulf %27, %27 : vector<8x256xf32>
    %30 = arith.addf %27, %28 : vector<8x256xf32>
    %31 = arith.mulf %28, %28 : vector<8x256xf32>
    %32 = arith.addf %29, %31 : vector<8x256xf32>
    %cst_19 = arith.constant dense<0.000000e+00> : vector<8xf32>
    %33 = vector.multi_reduction <add>, %30, %cst_19 [1] : vector<8x256xf32> to vector<8xf32>
    %34 = vector.shape_cast %33 : vector<8xf32> to vector<8x1xf32>
    %cst_20 = arith.constant 0.001953125 : f32
    %35 = vector.broadcast %cst_20 : f32 to vector<8x1xf32>
    %36 = arith.mulf %34, %35 : vector<8x1xf32>
    %cst_21 = arith.constant dense<0.000000e+00> : vector<8xf32>
    %37 = vector.multi_reduction <add>, %32, %cst_21 [1] : vector<8x256xf32> to vector<8xf32>
    %38 = vector.shape_cast %37 : vector<8xf32> to vector<8x1xf32>
    %cst_22 = arith.constant 0.001953125 : f32
    %39 = vector.broadcast %cst_22 : f32 to vector<8x1xf32>
    %40 = arith.mulf %38, %39 : vector<8x1xf32>
    %41 = arith.mulf %36, %36 : vector<8x1xf32>
    %42 = arith.subf %40, %41 : vector<8x1xf32>
    %cst_23 = arith.constant 9.99999974E-6 : f32
    %43 = vector.broadcast %cst_23 : f32 to vector<8x1xf32>
    %44 = arith.addf %42, %43 : vector<8x1xf32>
    %45 = math.rsqrt %44 : vector<8x1xf32>
    %46 = arith.mulf %7, %45 : vector<8x1xf32>
    %47 = arith.mulf %36, %46 : vector<8x1xf32>
    %48 = arith.subf %8, %47 : vector<8x1xf32>
    %49 = vector.broadcast %46 : vector<8x1xf32> to vector<8x256xf32>
    %50 = arith.mulf %27, %49 : vector<8x256xf32>
    %51 = vector.broadcast %48 : vector<8x1xf32> to vector<8x256xf32>
    %52 = arith.addf %50, %51 : vector<8x256xf32>
    %c0_24 = arith.constant 0 : index
    %c0_25 = arith.constant 0 : index
    %53 = vector.load %arg4[%c0_24, %c0_25] : memref<16x256xf32, #tpu.memory_space<vmem>>, vector<8x256xf32>
    tpu.vector_store %arg4[%c0_24, %c0_25], %52 {strides = array<i32>} : memref<16x256xf32, #tpu.memory_space<vmem>>, vector<8x256xf32>,
    %54 = vector.broadcast %46 : vector<8x1xf32> to vector<8x256xf32>
    %55 = arith.mulf %28, %54 : vector<8x256xf32>
    %56 = vector.broadcast %48 : vector<8x1xf32> to vector<8x256xf32>
    %57 = arith.addf %55, %56 : vector<8x256xf32>
    %c8_26 = arith.constant 8 : index
    %c0_27 = arith.constant 0 : index
    %58 = vector.load %arg4[%c8_26, %c0_27] : memref<16x256xf32, #tpu.memory_space<vmem>>, vector<8x256xf32>
    tpu.vector_store %arg4[%c8_26, %c0_27], %57 {strides = array<i32>} : memref<16x256xf32, #tpu.memory_space<vmem>>, vector<8x256xf32>,
    return
  }
  func.func @transform_0(%arg0: i32) -> (i32, i32) {
    %c0_i32 = arith.constant 0 : i32
    %c0_i32_0 = arith.constant 0 : i32
    %c0_i32_1 = arith.constant 0 : i32
    return %c0_i32, %c0_i32_0 : i32, i32
  }
  func.func @transform_1(%arg0: i32) -> (i32, i32) {
    %c0_i32 = arith.constant 0 : i32
    %c0_i32_0 = arith.constant 0 : i32
    %c0_i32_1 = arith.constant 0 : i32
    return %c0_i32, %c0_i32_0 : i32, i32
  }
  func.func @transform_2(%arg0: i32) -> (i32, i32) {
    %c0_i32 = arith.constant 0 : i32
    %c0_i32_0 = arith.constant 0 : i32
    %c0_i32_1 = arith.constant 0 : i32
    return %c0_i32, %c0_i32_0 : i32, i32
  }
  func.func @transform_3(%arg0: i32) -> (i32, i32) {
    %c0_i32 = arith.constant 0 : i32
    %c0_i32_0 = arith.constant 0 : i32
    %c0_i32_1 = arith.constant 0 : i32
    return %c0_i32, %c0_i32_0 : i32, i32
  }
}

</mosaic_0001>

<llo_original>
// kernel: tile.8
$region0: #{tile.8}
  #allocation0 [shape = 's32[1]{0}', space=sflag, size = 0x4, scoped, tag = 'scoped memory for tile.8']
  %s0 = inlined_call_operand.vmem [shape: f32[4], index: 0, kind: input, shape index: {}]
  %s1 = inlined_call_operand.vmem [shape: f32[2,4], index: 1, kind: output, shape index: {}]
  // Predicated region
  $region2: #{tile.8} parent=0 // pred_check
    _
  $region3: #{tile.8} parent=0 // pred_check_branch
    %3 = sbr.rel (0) target = $region5
  $region4: #{tile.8} parent=0 // pred_region
    _
  $region5: #{tile.8} parent=0 // pred_fallthru
    _
  %v4 = vld [vmem:[%s0] ss:$0 sm:$0xff]
  %5 = vst [vmem:[%s1] sm:$0x3] %v4

// kernel: guided_convolution.1
$region0: #{guided_convolution.1}
  #allocation0 [shape = 'u32[]', space=smem, size = 0x4, offset = 0x4, fixed_abs, tag = 'smem constant byte address 0x4 - core index']
  #allocation1 [shape = 'u32[144,128]{1,0:T(1,128)}', space=vmem, size = 0x12000, scoped, tag = 'internal scratch']
  %s0 = inlined_call_operand.vmem [shape: f32[88,384], index: 0, kind: input, shape index: {}]
  %s1 = inlined_call_operand.vmem [shape: bf16[384,256], index: 1, kind: input, shape index: {}]
  %s2 = inlined_call_operand.vmem [shape: f32[112,80], index: 2, kind: input, shape index: {}]
  %s3 = inlined_call_operand.vmem [shape: f32[16,256], index: 3, kind: output, shape index: {}]
  %s4 = sld [smem:[#allocation0]]
  $region22: #{guided_convolution.1} parent=0
    _
  %s6 = ssub.s32 1, %s4
  %s7 = scalar_select 0, %s6, %s4
  // Predicated region
  $region2: #{guided_convolution.1} parent=0 // pred_check
    _
  $region3: #{guided_convolution.1} parent=0 // pred_check_branch
    %9 = sbr.rel (0) target = $region5
  $region4: #{guided_convolution.1} parent=0 // pred_region
    _
  $region5: #{guided_convolution.1} parent=0 // pred_fallthru
    _
  // Predicated region
  $region6: #{guided_convolution.1} parent=0 // pred_check
    _
  $region7: #{guided_convolution.1} parent=0 // pred_check_branch
    %11 = sbr.rel (0) target = $region9
  $region8: #{guided_convolution.1} parent=0 // pred_region
    _
  $region9: #{guided_convolution.1} parent=0 // pred_fallthru
    _
  // Predicated region
  $region10: #{guided_convolution.1} parent=0 // pred_check
    _
  $region11: #{guided_convolution.1} parent=0 // pred_check_branch
    %13 = sbr.rel (0) target = $region13
  $region12: #{guided_convolution.1} parent=0 // pred_region
    _
  $region13: #{guided_convolution.1} parent=0 // pred_fallthru
    _
  %v14 = vld [vmem:[%s0] sm:$0xff]
  %v15 = vld [vmem:[%s0 + $0x8] sm:$0xff]
  %v16 = vld [vmem:[%s0 + $0x10] sm:$0xff]
  %v17 = vld [vmem:[%s0 + $0x18] sm:$0xff]
  %v18 = vld [vmem:[%s0 + $0x20] sm:$0xff]
  %v19 = vld [vmem:[%s0 + $0x28] sm:$0xff]
  %v20 = vld [vmem:[%s0 + $0x30] sm:$0xff]
  %v21 = vld [vmem:[%s0 + $0x38] sm:$0xff]
  %v22 = vld [vmem:[%s0 + $0x40] sm:$0xff]
  %v23 = vld [vmem:[%s0 + $0x48] sm:$0xff]
  %v24 = vld [vmem:[%s0 + $0x50] sm:$0xff]
  %v25 = vld [vmem:[%s0 + $0x58] sm:$0xff]
  %v26 = vld [vmem:[%s0 + $0x60] sm:$0xff]
  %v27 = vld [vmem:[%s0 + $0x68] sm:$0xff]
  %v28 = vld [vmem:[%s0 + $0x70] sm:$0xff]
  %v29 = vld [vmem:[%s0 + $0x78] sm:$0xff]
  %v30 = vld [vmem:[%s0 + $0x80] sm:$0xff]
  %v31 = vld [vmem:[%s0 + $0x88] sm:$0xff]
  %v32 = vld [vmem:[%s0 + $0x90] sm:$0xff]
  %v33 = vld [vmem:[%s0 + $0x98] sm:$0xff]
  %v34 = vld [vmem:[%s0 + $0xa0] sm:$0xff]
  %v35 = vld [vmem:[%s0 + $0xa8] sm:$0xff]
  %v36 = vld [vmem:[%s0 + $0xb0] sm:$0xff]
  %v37 = vld [vmem:[%s0 + $0xb8] sm:$0xff]
  %v38 = vld [vmem:[%s0 + $0xc0] sm:$0xff]
  %v39 = vld [vmem:[%s0 + $0xc8] sm:$0xff]
  %v40 = vld [vmem:[%s0 + $0xd0] sm:$0xff]
  %v41 = vld [vmem:[%s0 + $0xd8] sm:$0xff]
  %v42 = vld [vmem:[%s0 + $0xe0] sm:$0xff]
  %v43 = vld [vmem:[%s0 + $0xe8] sm:$0xff]
  %v44 = vld [vmem:[%s0 + $0xf0] sm:$0xff]
  %v45 = vld [vmem:[%s0 + $0xf8] sm:$0xff]
  %v46 = vld [vmem:[%s0 + $0x100] sm:$0xff]
  %v47 = vld [vmem:[%s2] sm:$0xff]
  %v48 = vld [vmem:[%s2 + $0x8] sm:$0xff]
  %v49 = vld [vmem:[%s2 + $0x10] sm:$0xff]
  %v50 = vld [vmem:[%s2 + $0x18] sm:$0xff]
  %v51 = vld [vmem:[%s2 + $0x20] sm:$0xff]
  %v52 = vld [vmem:[%s2 + $0x28] sm:$0xff]
  %v53 = vld [vmem:[%s2 + $0x30] sm:$0xff]
  %v54 = vld [vmem:[%s2 + $0x38] sm:$0xff]
  %v55 = vld [vmem:[%s2 + $0x40] sm:$0xff]
  %v56 = vld [vmem:[%s2 + $0x48] sm:$0xff]
  %v57 = vld [vmem:[%s2 + $0x50] sm:$0xff]
  %v58 = vld [vmem:[%s2 + $0x58] sm:$0xff]
  %v59 = vld [vmem:[%s2 + $0x60] sm:$0xff]
  %v60 = vld [vmem:[%s2 + $0x68] sm:$0xff]
  %vm61 = vcmask 654336
  %v63 = vsel %vm61, %v47, 0
  %65 = vmatprep.subr.mxu0 %v15
  %66 = vmatpush1.msra.mxu0 %v14
  %67 = vmatprep.subr.mxu0 %v18
  %68 = vmatpush1.msra.mxu0 %v17
  %69 = vmatprep.subr.mxu0 %v21
  %70 = vmatpush1.msra.mxu0 %v20
  %71 = vmatprep.subr.mxu0 %v24
  %72 = vmatpush1.msra.mxu0 %v23
  %73 = vmatprep.subr.mxu0 %v27
  %74 = vmatpush1.msra.mxu0 %v26
  %75 = vmatprep.subr.mxu0 %v30
  %76 = vmatpush1.msra.mxu0 %v29
  %77 = vmatprep.subr.mxu0 %v33
  %78 = vmatpush1.msra.mxu0 %v32
  %79 = vmatprep.subr.mxu0 %v36
  %80 = vmatpush1.msra.mxu0 %v35
  %81 = vmatprep.subr.mxu0 %v39
  %82 = vmatpush1.msra.mxu0 %v38
  %83 = vmatprep.subr.mxu0 %v42
  %84 = vmatpush1.msra.mxu0 %v41
  %85 = vmatprep.subr.mxu0 0.0
  %86 = vmatpush1.msra.mxu0 0.0
  %87 = vmatprep.subr.mxu0 0.0
  %88 = vmatpush1.msra.mxu0 0.0
  %89 = vmatprep.subr.mxu0 0.0
  %90 = vmatpush1.msra.mxu0 0.0
  %91 = vmatprep.subr.mxu0 0.0
  %92 = vmatpush1.msra.mxu0 0.0
  %93 = vmatprep.subr.mxu0 0.0
  %94 = vmatpush1.msra.mxu0 0.0
  %95 = vmatprep.subr.mxu0 0.0
  %96 = vmatpush1.msra.mxu0 0.0
  %97 = vmatprep.subr.mxu0 0.0
  %98 = vmatpush1.msra.mxu0 0.0
  %99 = vmatprep.subr.mxu0 0.0
  %100 = vmatpush1.msra.mxu0 0.0
  %101 = vmatprep.subr.mxu0 0.0
  %102 = vmatpush1.msra.mxu0 0.0
  %103 = vmatprep.subr.mxu0 0.0
  %104 = vmatpush1.msra.mxu0 0.0
  %105 = vmatprep.subr.mxu0 0.0
  %106 = vmatpush1.msra.mxu0 0.0
  %107 = vmatprep.subr.mxu0 0.0
  %108 = vmatpush1.msra.mxu0 0.0
  %109 = vmatprep.subr.mxu0 0.0
  %110 = vmatpush1.msra.mxu0 0.0
  %111 = vmatprep.subr.mxu0 0.0
  %112 = vmatpush1.msra.mxu0 0.0
  %113 = vmatprep.subr.mxu0 0.0
  %114 = vmatpush1.msra.mxu0 0.0
  %115 = vmatprep.subr.mxu0 0.0
  %116 = vmatpush1.msra.mxu0 0.0
  %117 = vmatprep.subr.mxu0 0.0
  %118 = vmatpush1.msra.mxu0 0.0
  %119 = vmatprep.subr.mxu0 0.0
  %120 = vmatpush1.msra.mxu0 0.0
  %121 = vmatprep.subr.mxu0 0.0
  %122 = vmatpush1.msra.mxu0 0.0
  %123 = vmatprep.subr.mxu0 0.0
  %124 = vmatpush1.msra.mxu0 0.0
  %125 = vmatprep.subr.mxu0 0.0
  %126 = vmatpush1.msra.mxu0 0.0
  %127 = vmatprep.subr.mxu0 0.0
  %128 = vmatpush1.msra.mxu0 0.0
  %129 = vmatprep.mubr.f32.mxu0 0.0
  %130 = vmatmul.mubr.f32.gmra.mrb[0].mxu0 %v63
  %v131 = vpop.f32.mrb[0].mxu0
  %v132 = vadd.f32 0.0, %v131
  %v133 = vpop.f32.mrb[0].mxu0
  %v134 = vadd.f32 0.0, %v133
  %135 = vdwg.mxu0
  %136 = vmatprep.subr.mxu0 0.0
  %137 = vmatpush1.msra.mxu0 %v16
  %138 = vmatprep.subr.mxu0 0.0
  %139 = vmatpush1.msra.mxu0 %v19
  %140 = vmatprep.subr.mxu0 0.0
  %141 = vmatpush1.msra.mxu0 %v22
  %142 = vmatprep.subr.mxu0 0.0
  %143 = vmatpush1.msra.mxu0 %v25
  %144 = vmatprep.subr.mxu0 0.0
  %145 = vmatpush1.msra.mxu0 %v28
  %146 = vmatprep.subr.mxu0 0.0
  %147 = vmatpush1.msra.mxu0 %v31
  %148 = vmatprep.subr.mxu0 0.0
  %149 = vmatpush1.msra.mxu0 %v34
  %150 = vmatprep.subr.mxu0 0.0
  %151 = vmatpush1.msra.mxu0 %v37
  %152 = vmatprep.subr.mxu0 0.0
  %153 = vmatpush1.msra.mxu0 %v40
  %154 = vmatprep.subr.mxu0 0.0
  %155 = vmatpush1.msra.mxu0 %v43
  %156 = vmatprep.subr.mxu0 0.0
  %157 = vmatpush1.msra.mxu0 0.0
  %158 = vmatprep.subr.mxu0 0.0
  %159 = vmatpush1.msra.mxu0 0.0
  %160 = vmatprep.subr.mxu0 0.0
  %161 = vmatpush1.msra.mxu0 0.0
  %162 = vmatprep.subr.mxu0 0.0
  %163 = vmatpush1.msra.mxu0 0.0
  %164 = vmatprep.subr.mxu0 0.0
  %165 = vmatpush1.msra.mxu0 0.0
  %166 = vmatprep.subr.mxu0 0.0
  %167 = vmatpush1.msra.mxu0 0.0
  %168 = vmatprep.subr.mxu0 0.0
  %169 = vmatpush1.msra.mxu0 0.0
  %170 = vmatprep.subr.mxu0 0.0
  %171 = vmatpush1.msra.mxu0 0.0
  %172 = vmatprep.subr.mxu0 0.0
  %173 = vmatpush1.msra.mxu0 0.0
  %174 = vmatprep.subr.mxu0 0.0
  %175 = vmatpush1.msra.mxu0 0.0
  %176 = vmatprep.subr.mxu0 0.0
  %177 = vmatpush1.msra.mxu0 0.0
  %178 = vmatprep.subr.mxu0 0.0
  %179 = vmatpush1.msra.mxu0 0.0
  %180 = vmatprep.subr.mxu0 0.0
  %181 = vmatpush1.msra.mxu0 0.0
  %182 = vmatprep.subr.mxu0 0.0
  %183 = vmatpush1.msra.mxu0 0.0
  %184 = vmatprep.subr.mxu0 0.0
  %185 = vmatpush1.msra.mxu0 0.0
  %186 = vmatprep.subr.mxu0 0.0
  %187 = vmatpush1.msra.mxu0 0.0
  %188 = vmatprep.subr.mxu0 0.0
  %189 = vmatpush1.msra.mxu0 0.0
  %190 = vmatprep.subr.mxu0 0.0
  %191 = vmatpush1.msra.mxu0 0.0
  %192 = vmatprep.subr.mxu0 0.0
  %193 = vmatpush1.msra.mxu0 0.0
  %194 = vmatprep.subr.mxu0 0.0
  %195 = vmatpush1.msra.mxu0 0.0
  %196 = vmatprep.subr.mxu0 0.0
  %197 = vmatpush1.msra.mxu0 0.0
  %198 = vmatprep.subr.mxu0 0.0
  %199 = vmatpush1.msra.mxu0 0.0
  %200 = vmatprep.mubr.f32.mxu0 0.0
  %201 = vmatmul.mubr.f32.gmra.mrb[0].mxu0 %v63
  %v202 = vpop.f32.mrb[0].mxu0
  %v203 = vadd.f32 0.0, %v202
  %v204 = vpop.f32.mrb[0].mxu0
  %205 = vdwg.mxu0
  %v206 = vmul.f32 %v44, %v132
  %v207 = vmul.f32 %v45, %v134
  %v208 = vmul.f32 %v46, %v203
  %v210 = vsel %vm61, %v48, 0
  %v213 = vsel %vm61, %v49, 0
  %v216 = vsel %vm61, %v50, 0
  %v219 = vsel %vm61, %v51, 0
  %221 = vmatprep.subr.mxu0 %v15
  %222 = vmatpush1.msra.mxu0 %v14
  %223 = vmatprep.subr.mxu0 %v18
  %224 = vmatpush1.msra.mxu0 %v17
  %225 = vmatprep.subr.mxu0 %v21
  %226 = vmatpush1.msra.mxu0 %v20
  %227 = vmatprep.subr.mxu0 %v24
  %228 = vmatpush1.msra.mxu0 %v23
  %229 = vmatprep.subr.mxu0 %v27
  %230 = vmatpush1.msra.mxu0 %v26
  %231 = vmatprep.subr.mxu0 %v30
  %232 = vmatpush1.msra.mxu0 %v29
  %233 = vmatprep.subr.mxu0 %v33
  %234 = vmatpush1.msra.mxu0 %v32
  %235 = vmatprep.subr.mxu0 %v36
  %236 = vmatpush1.msra.mxu0 %v35
  %237 = vmatprep.subr.mxu0 %v39
  %238 = vmatpush1.msra.mxu0 %v38
  %239 = vmatprep.subr.mxu0 %v42
  %240 = vmatpush1.msra.mxu0 %v41
  %241 = vmatprep.subr.mxu0 0.0
  %242 = vmatpush1.msra.mxu0 0.0
  %243 = vmatprep.subr.mxu0 0.0
  %244 = vmatpush1.msra.mxu0 0.0
  %245 = vmatprep.subr.mxu0 0.0
  %246 = vmatpush1.msra.mxu0 0.0
  %247 = vmatprep.subr.mxu0 0.0
  %248 = vmatpush1.msra.mxu0 0.0
  %249 = vmatprep.subr.mxu0 0.0
  %250 = vmatpush1.msra.mxu0 0.0
  %251 = vmatprep.subr.mxu0 0.0
  %252 = vmatpush1.msra.mxu0 0.0
  %253 = vmatprep.subr.mxu0 0.0
  %254 = vmatpush1.msra.mxu0 0.0
  %255 = vmatprep.subr.mxu0 0.0
  %256 = vmatpush1.msra.mxu0 0.0
  %257 = vmatprep.subr.mxu0 0.0
  %258 = vmatpush1.msra.mxu0 0.0
  %259 = vmatprep.subr.mxu0 0.0
  %260 = vmatpush1.msra.mxu0 0.0
  %261 = vmatprep.subr.mxu0 0.0
  %262 = vmatpush1.msra.mxu0 0.0
  %263 = vmatprep.subr.mxu0 0.0
  %264 = vmatpush1.msra.mxu0 0.0
  %265 = vmatprep.subr.mxu0 0.0
  %266 = vmatpush1.msra.mxu0 0.0
  %267 = vmatprep.subr.mxu0 0.0
  %268 = vmatpush1.msra.mxu0 0.0
  %269 = vmatprep.subr.mxu0 0.0
  %270 = vmatpush1.msra.mxu0 0.0
  %271 = vmatprep.subr.mxu0 0.0
  %272 = vmatpush1.msra.mxu0 0.0
  %273 = vmatprep.subr.mxu0 0.0
  %274 = vmatpush1.msra.mxu0 0.0
  %275 = vmatprep.subr.mxu0 0.0
  %276 = vmatpush1.msra.mxu0 0.0
  %277 = vmatprep.subr.mxu0 0.0
  %278 = vmatpush1.msra.mxu0 0.0
  %279 = vmatprep.subr.mxu0 0.0
  %280 = vmatpush1.msra.mxu0 0.0
  %281 = vmatprep.subr.mxu0 0.0
  %282 = vmatpush1.msra.mxu0 0.0
  %283 = vmatprep.subr.mxu0 0.0
  %284 = vmatpush1.msra.mxu0 0.0
  %285 = vmatprep.mubr.f32.mxu0 0.0
  %286 = vmatmul.mubr.f32.gmra.mrb[0].mxu0 %v210
  %v287 = vpop.f32.mrb[0].mxu0
  %v288 = vadd.f32 0.0, %v287
  %v289 = vpop.f32.mrb[0].mxu0
  %v290 = vadd.f32 0.0, %v289
  %291 = vmatprep.mubr.f32.mxu0 0.0
  %292 = vmatmul.mubr.f32.gmra.mrb[0].mxu0 %v213
  %v293 = vpop.f32.mrb[0].mxu0
  %v294 = vadd.f32 0.0, %v293
  %v295 = vpop.f32.mrb[0].mxu0
  %v296 = vadd.f32 0.0, %v295
  %297 = vmatprep.mubr.f32.mxu0 0.0
  %298 = vmatmul.mubr.f32.gmra.mrb[0].mxu0 %v216
  %v299 = vpop.f32.mrb[0].mxu0
  %v300 = vadd.f32 0.0, %v299
  %v301 = vpop.f32.mrb[0].mxu0
  %v302 = vadd.f32 0.0, %v301
  %303 = vmatprep.mubr.f32.mxu0 0.0
  %304 = vmatmul.mubr.f32.gmra.mrb[0].mxu0 %v219
  %v305 = vpop.f32.mrb[0].mxu0
  %v306 = vadd.f32 0.0, %v305
  %v307 = vpop.f32.mrb[0].mxu0
  %v308 = vadd.f32 0.0, %v307
  %309 = vdwg.mxu0
  %310 = vmatprep.subr.mxu0 0.0
  %311 = vmatpush1.msra.mxu0 %v16
  %312 = vmatprep.subr.mxu0 0.0
  %313 = vmatpush1.msra.mxu0 %v19
  %314 = vmatprep.subr.mxu0 0.0
  %315 = vmatpush1.msra.mxu0 %v22
  %316 = vmatprep.subr.mxu0 0.0
  %317 = vmatpush1.msra.mxu0 %v25
  %318 = vmatprep.subr.mxu0 0.0
  %319 = vmatpush1.msra.mxu0 %v28
  %320 = vmatprep.subr.mxu0 0.0
  %321 = vmatpush1.msra.mxu0 %v31
  %322 = vmatprep.subr.mxu0 0.0
  %323 = vmatpush1.msra.mxu0 %v34
  %324 = vmatprep.subr.mxu0 0.0
  %325 = vmatpush1.msra.mxu0 %v37
  %326 = vmatprep.subr.mxu0 0.0
  %327 = vmatpush1.msra.mxu0 %v40
  %328 = vmatprep.subr.mxu0 0.0
  %329 = vmatpush1.msra.mxu0 %v43
  %330 = vmatprep.subr.mxu0 0.0
  %331 = vmatpush1.msra.mxu0 0.0
  %332 = vmatprep.subr.mxu0 0.0
  %333 = vmatpush1.msra.mxu0 0.0
  %334 = vmatprep.subr.mxu0 0.0
  %335 = vmatpush1.msra.mxu0 0.0
  %336 = vmatprep.subr.mxu0 0.0
  %337 = vmatpush1.msra.mxu0 0.0
  %338 = vmatprep.subr.mxu0 0.0
  %339 = vmatpush1.msra.mxu0 0.0
  %340 = vmatprep.subr.mxu0 0.0
  %341 = vmatpush1.msra.mxu0 0.0
  %342 = vmatprep.subr.mxu0 0.0
  %343 = vmatpush1.msra.mxu0 0.0
  %344 = vmatprep.subr.mxu0 0.0
  %345 = vmatpush1.msra.mxu0 0.0
  %346 = vmatprep.subr.mxu0 0.0
  %347 = vmatpush1.msra.mxu0 0.0
  %348 = vmatprep.subr.mxu0 0.0
  %349 = vmatpush1.msra.mxu0 0.0
  %350 = vmatprep.subr.mxu0 0.0
  %351 = vmatpush1.msra.mxu0 0.0
  %352 = vmatprep.subr.mxu0 0.0
  %353 = vmatpush1.msra.mxu0 0.0
  %354 = vmatprep.subr.mxu0 0.0
  %355 = vmatpush1.msra.mxu0 0.0
  %356 = vmatprep.subr.mxu0 0.0
  %357 = vmatpush1.msra.mxu0 0.0
  %358 = vmatprep.subr.mxu0 0.0
  %359 = vmatpush1.msra.mxu0 0.0
  %360 = vmatprep.subr.mxu0 0.0
  %361 = vmatpush1.msra.mxu0 0.0
  %362 = vmatprep.subr.mxu0 0.0
  %363 = vmatpush1.msra.mxu0 0.0
  %364 = vmatprep.subr.mxu0 0.0
  %365 = vmatpush1.msra.mxu0 0.0
  %366 = vmatprep.subr.mxu0 0.0
  %367 = vmatpush1.msra.mxu0 0.0
  %368 = vmatprep.subr.mxu0 0.0
  %369 = vmatpush1.msra.mxu0 0.0
  %370 = vmatprep.subr.mxu0 0.0
  %371 = vmatpush1.msra.mxu0 0.0
  %372 = vmatprep.subr.mxu0 0.0
  %373 = vmatpush1.msra.mxu0 0.0
  %374 = vmatprep.mubr.f32.mxu0 0.0
  %375 = vmatmul.mubr.f32.gmra.mrb[0].mxu0 %v210
  %v376 = vpop.f32.mrb[0].mxu0
  %v377 = vadd.f32 0.0, %v376
  %v378 = vpop.f32.mrb[0].mxu0
  %379 = vmatprep.mubr.f32.mxu0 0.0
  %380 = vmatmul.mubr.f32.gmra.mrb[0].mxu0 %v213
  %v381 = vpop.f32.mrb[0].mxu0
  %v382 = vadd.f32 0.0, %v381
  %v383 = vpop.f32.mrb[0].mxu0
  %384 = vmatprep.mubr.f32.mxu0 0.0
  %385 = vmatmul.mubr.f32.gmra.mrb[0].mxu0 %v216
  %v386 = vpop.f32.mrb[0].mxu0
  %v387 = vadd.f32 0.0, %v386
  %v388 = vpop.f32.mrb[0].mxu0
  %389 = vmatprep.mubr.f32.mxu0 0.0
  %390 = vmatmul.mubr.f32.gmra.mrb[0].mxu0 %v219
  %v391 = vpop.f32.mrb[0].mxu0
  %v392 = vadd.f32 0.0, %v391
  %v393 = vpop.f32.mrb[0].mxu0
  %394 = vdwg.mxu0
  %v395 = vadd.f32 %v288, %v290
  %v396 = vadd.f32 %v395, %v377
  %397 = vadd.xlane.f32.xlu0 %v396
  %v398 = vpop.xlane.xlu0 %397
  %v399 = vadd.f32 %v294, %v296
  %v400 = vadd.f32 %v399, %v382
  %401 = vadd.xlane.f32.xlu0 %v400
  %v402 = vpop.xlane.xlu0 %401
  %v403 = vadd.f32 %v300, %v302
  %v404 = vadd.f32 %v403, %v387
  %405 = vadd.xlane.f32.xlu0 %v404
  %v406 = vpop.xlane.xlu0 %405
  %v407 = vadd.f32 %v306, %v308
  %v408 = vadd.f32 %v407, %v392
  %409 = vadd.xlane.f32.xlu0 %v408
  %v410 = vpop.xlane.xlu0 %409
  %v411 = vmul.f32 %v398, %v52
  %v412 = vmul.f32 %v402, %v53
  %v413 = vmul.f32 %v406, %v54
  %v414 = vmul.f32 %v410, %v55
  %vm415 = vcmask 261120
  %v417 = vsel %vm415, %v56, 0
  %v420 = vsel %vm415, %v57, 0
  %422 = vmatprep.subr.mxu0 0.0
  %423 = vmatpush1.msra.mxu0 %v411
  %424 = vmatprep.subr.mxu0 0.0
  %425 = vmatpush1.msra.mxu0 %v412
  %426 = vmatprep.subr.mxu0 0.0
  %427 = vmatpush1.msra.mxu0 %v413
  %428 = vmatprep.subr.mxu0 0.0
  %429 = vmatpush1.msra.mxu0 %v414
  %430 = vmatprep.subr.mxu0 0.0
  %431 = vmatpush1.msra.mxu0 0.0
  %432 = vmatprep.subr.mxu0 0.0
  %433 = vmatpush1.msra.mxu0 0.0
  %434 = vmatprep.subr.mxu0 0.0
  %435 = vmatpush1.msra.mxu0 0.0
  %436 = vmatprep.subr.mxu0 0.0
  %437 = vmatpush1.msra.mxu0 0.0
  %438 = vmatprep.subr.mxu0 0.0
  %439 = vmatpush1.msra.mxu0 0.0
  %440 = vmatprep.subr.mxu0 0.0
  %441 = vmatpush1.msra.mxu0 0.0
  %442 = vmatprep.subr.mxu0 0.0
  %443 = vmatpush1.msra.mxu0 0.0
  %444 = vmatprep.subr.mxu0 0.0
  %445 = vmatpush1.msra.mxu0 0.0
  %446 = vmatprep.subr.mxu0 0.0
  %447 = vmatpush1.msra.mxu0 0.0
  %448 = vmatprep.subr.mxu0 0.0
  %449 = vmatpush1.msra.mxu0 0.0
  %450 = vmatprep.subr.mxu0 0.0
  %451 = vmatpush1.msra.mxu0 0.0
  %452 = vmatprep.subr.mxu0 0.0
  %453 = vmatpush1.msra.mxu0 0.0
  %454 = vmatprep.subr.mxu0 0.0
  %455 = vmatpush1.msra.mxu0 0.0
  %456 = vmatprep.subr.mxu0 0.0
  %457 = vmatpush1.msra.mxu0 0.0
  %458 = vmatprep.subr.mxu0 0.0
  %459 = vmatpush1.msra.mxu0 0.0
  %460 = vmatprep.subr.mxu0 0.0
  %461 = vmatpush1.msra.mxu0 0.0
  %462 = vmatprep.subr.mxu0 0.0
  %463 = vmatpush1.msra.mxu0 0.0
  %464 = vmatprep.subr.mxu0 0.0
  %465 = vmatpush1.msra.mxu0 0.0
  %466 = vmatprep.subr.mxu0 0.0
  %467 = vmatpush1.msra.mxu0 0.0
  %468 = vmatprep.subr.mxu0 0.0
  %469 = vmatpush1.msra.mxu0 0.0
  %470 = vmatprep.subr.mxu0 0.0
  %471 = vmatpush1.msra.mxu0 0.0
  %472 = vmatprep.subr.mxu0 0.0
  %473 = vmatpush1.msra.mxu0 0.0
  %474 = vmatprep.subr.mxu0 0.0
  %475 = vmatpush1.msra.mxu0 0.0
  %476 = vmatprep.subr.mxu0 0.0
  %477 = vmatpush1.msra.mxu0 0.0
  %478 = vmatprep.subr.mxu0 0.0
  %479 = vmatpush1.msra.mxu0 0.0
  %480 = vmatprep.subr.mxu0 0.0
  %481 = vmatpush1.msra.mxu0 0.0
  %482 = vmatprep.subr.mxu0 0.0
  %483 = vmatpush1.msra.mxu0 0.0
  %484 = vmatprep.subr.mxu0 0.0
  %485 = vmatpush1.msra.mxu0 0.0
  %486 = vmatprep.mubr.f32.mxu0 0.0
  %487 = vmatmul.mubr.f32.gmra.mrb[0].mxu0 %v417
  %v488 = vpop.f32.mrb[0].mxu0
  %v489 = vadd.f32 %v58, %v488
  %v490 = vpop.f32.mrb[0].mxu0
  %491 = vmatprep.mubr.f32.mxu0 0.0
  %492 = vmatmul.mubr.f32.gmra.mrb[0].mxu0 %v420
  %v493 = vpop.f32.mrb[0].mxu0
  %v494 = vadd.f32 %v59, %v493
  %v495 = vpop.f32.mrb[0].mxu0
  %496 = vdwg.mxu0
  %v497 = vld [vmem:[%s1] sm:$0xff]
  %v498 = vld [vmem:[%s1 + $0x8] sm:$0xff]
  %v499 = vld [vmem:[%s1 + $0x10] sm:$0xff]
  %v500 = vld [vmem:[%s1 + $0x18] sm:$0xff]
  %v501 = vld [vmem:[%s1 + $0x20] sm:$0xff]
  %v502 = vld [vmem:[%s1 + $0x28] sm:$0xff]
  %v503 = vld [vmem:[%s1 + $0x30] sm:$0xff]
  %v504 = vld [vmem:[%s1 + $0x38] sm:$0xff]
  %v505 = vld [vmem:[%s1 + $0x40] sm:$0xff]
  %v506 = vld [vmem:[%s1 + $0x48] sm:$0xff]
  %v507 = vld [vmem:[%s1 + $0x50] sm:$0xff]
  %v508 = vld [vmem:[%s1 + $0x58] sm:$0xff]
  %v509 = vld [vmem:[%s1 + $0x60] sm:$0xff]
  %v510 = vld [vmem:[%s1 + $0x68] sm:$0xff]
  %v511 = vld [vmem:[%s1 + $0x70] sm:$0xff]
  %v512 = vld [vmem:[%s1 + $0x78] sm:$0xff]
  %v513 = vld [vmem:[%s1 + $0x80] sm:$0xff]
  %v514 = vld [vmem:[%s1 + $0x88] sm:$0xff]
  %v515 = vld [vmem:[%s1 + $0x90] sm:$0xff]
  %v516 = vld [vmem:[%s1 + $0x98] sm:$0xff]
  %v517 = vld [vmem:[%s1 + $0xa0] sm:$0xff]
  %v518 = vld [vmem:[%s1 + $0xa8] sm:$0xff]
  %v519 = vld [vmem:[%s1 + $0xb0] sm:$0xff]
  %v520 = vld [vmem:[%s1 + $0xb8] sm:$0xff]
  %v521 = vld [vmem:[%s1 + $0xc0] sm:$0xff]
  %v522 = vld [vmem:[%s1 + $0xc8] sm:$0xff]
  %v523 = vld [vmem:[%s1 + $0xd0] sm:$0xff]
  %v524 = vld [vmem:[%s1 + $0xd8] sm:$0xff]
  %v525 = vld [vmem:[%s1 + $0xe0] sm:$0xff]
  %v526 = vld [vmem:[%s1 + $0xe8] sm:$0xff]
  %v527 = vld [vmem:[%s1 + $0xf0] sm:$0xff]
  %v528 = vld [vmem:[%s1 + $0xf8] sm:$0xff]
  %v529 = vld [vmem:[%s1 + $0x100] sm:$0xff]
  %v530 = vld [vmem:[%s1 + $0x108] sm:$0xff]
  %v531 = vld [vmem:[%s1 + $0x110] sm:$0xff]
  %v532 = vld [vmem:[%s1 + $0x118] sm:$0xff]
  %v533 = vld [vmem:[%s1 + $0x120] sm:$0xff]
  %v534 = vld [vmem:[%s1 + $0x128] sm:$0xff]
  %v535 = vld [vmem:[%s1 + $0x130] sm:$0xff]
  %v536 = vld [vmem:[%s1 + $0x138] sm:$0xff]
  %v537 = vld [vmem:[%s1 + $0x140] sm:$0xff]
  %v538 = vld [vmem:[%s1 + $0x148] sm:$0xff]
  %v539 = vld [vmem:[%s1 + $0x150] sm:$0xff]
  %v540 = vld [vmem:[%s1 + $0x158] sm:$0xff]
  %v541 = vld [vmem:[%s1 + $0x160] sm:$0xff]
  %v542 = vld [vmem:[%s1 + $0x168] sm:$0xff]
  %v543 = vld [vmem:[%s1 + $0x170] sm:$0xff]
  %v544 = vld [vmem:[%s1 + $0x178] sm:$0xff]
  %v545 = vunpack.c.l.bf16 %v497
  %v546 = vunpack.c.h.bf16 %v497
  %v547 = vunpack.c.l.bf16 %v498
  %v548 = vunpack.c.h.bf16 %v498
  %v549 = vunpack.c.l.bf16 %v499
  %v550 = vunpack.c.h.bf16 %v499
  %v551 = vunpack.c.l.bf16 %v500
  %v552 = vunpack.c.h.bf16 %v500
  %v553 = vunpack.c.l.bf16 %v501
  %v554 = vunpack.c.h.bf16 %v501
  %v555 = vunpack.c.l.bf16 %v502
  %v556 = vunpack.c.h.bf16 %v502
  %v557 = vunpack.c.l.bf16 %v503
  %v558 = vunpack.c.h.bf16 %v503
  %v559 = vunpack.c.l.bf16 %v504
  %v560 = vunpack.c.h.bf16 %v504
  %v561 = vunpack.c.l.bf16 %v505
  %v562 = vunpack.c.h.bf16 %v505
  %v563 = vunpack.c.l.bf16 %v506
  %v564 = vunpack.c.h.bf16 %v506
  %v565 = vunpack.c.l.bf16 %v507
  %v566 = vunpack.c.h.bf16 %v507
  %v567 = vunpack.c.l.bf16 %v508
  %v568 = vunpack.c.h.bf16 %v508
  %v569 = vunpack.c.l.bf16 %v509
  %v570 = vunpack.c.h.bf16 %v509
  %v571 = vunpack.c.l.bf16 %v510
  %v572 = vunpack.c.h.bf16 %v510
  %v573 = vunpack.c.l.bf16 %v511
  %v574 = vunpack.c.h.bf16 %v511
  %v575 = vunpack.c.l.bf16 %v512
  %v576 = vunpack.c.h.bf16 %v512
  %v577 = vunpack.c.l.bf16 %v513
  %v578 = vunpack.c.h.bf16 %v513
  %v579 = vunpack.c.l.bf16 %v514
  %v580 = vunpack.c.h.bf16 %v514
  %v581 = vunpack.c.l.bf16 %v515
  %v582 = vunpack.c.h.bf16 %v515
  %v583 = vunpack.c.l.bf16 %v516
  %v584 = vunpack.c.h.bf16 %v516
  %v585 = vunpack.c.l.bf16 %v517
  %v586 = vunpack.c.h.bf16 %v517
  %v587 = vunpack.c.l.bf16 %v518
  %v588 = vunpack.c.h.bf16 %v518
  %v589 = vunpack.c.l.bf16 %v519
  %v590 = vunpack.c.h.bf16 %v519
  %v591 = vunpack.c.l.bf16 %v520
  %v592 = vunpack.c.h.bf16 %v520
  %v593 = vunpack.c.l.bf16 %v521
  %v594 = vunpack.c.h.bf16 %v521
  %v595 = vunpack.c.l.bf16 %v522
  %v596 = vunpack.c.h.bf16 %v522
  %v597 = vunpack.c.l.bf16 %v523
  %v598 = vunpack.c.h.bf16 %v523
  %v599 = vunpack.c.l.bf16 %v524
  %v600 = vunpack.c.h.bf16 %v524
  %v601 = vunpack.c.l.bf16 %v525
  %v602 = vunpack.c.h.bf16 %v525
  %v603 = vunpack.c.l.bf16 %v526
  %v604 = vunpack.c.h.bf16 %v526
  %v605 = vunpack.c.l.bf16 %v527
  %v606 = vunpack.c.h.bf16 %v527
  %v607 = vunpack.c.l.bf16 %v528
  %v608 = vunpack.c.h.bf16 %v528
  %v609 = vunpack.c.l.bf16 %v529
  %v610 = vunpack.c.h.bf16 %v529
  %v611 = vunpack.c.l.bf16 %v530
  %v612 = vunpack.c.h.bf16 %v530
  %v613 = vunpack.c.l.bf16 %v531
  %v614 = vunpack.c.h.bf16 %v531
  %v615 = vunpack.c.l.bf16 %v532
  %v616 = vunpack.c.h.bf16 %v532
  %v617 = vunpack.c.l.bf16 %v533
  %v618 = vunpack.c.h.bf16 %v533
  %v619 = vunpack.c.l.bf16 %v534
  %v620 = vunpack.c.h.bf16 %v534
  %v621 = vunpack.c.l.bf16 %v535
  %v622 = vunpack.c.h.bf16 %v535
  %v623 = vunpack.c.l.bf16 %v536
  %v624 = vunpack.c.h.bf16 %v536
  %v625 = vunpack.c.l.bf16 %v537
  %v626 = vunpack.c.h.bf16 %v537
  %v627 = vunpack.c.l.bf16 %v538
  %v628 = vunpack.c.h.bf16 %v538
  %v629 = vunpack.c.l.bf16 %v539
  %v630 = vunpack.c.h.bf16 %v539
  %v631 = vunpack.c.l.bf16 %v540
  %v632 = vunpack.c.h.bf16 %v540
  %v633 = vunpack.c.l.bf16 %v541
  %v634 = vunpack.c.h.bf16 %v541
  %v635 = vunpack.c.l.bf16 %v542
  %v636 = vunpack.c.h.bf16 %v542
  %v637 = vunpack.c.l.bf16 %v543
  %v638 = vunpack.c.h.bf16 %v543
  %v639 = vunpack.c.l.bf16 %v544
  %v640 = vunpack.c.h.bf16 %v544
  %641 = vmatprep.subr.mxu0 %v546
  %642 = vmatpush1.msra.mxu0 %v545
  %643 = vmatprep.subr.mxu0 %v548
  %644 = vmatpush1.msra.mxu0 %v547
  %645 = vmatprep.subr.mxu0 %v550
  %646 = vmatpush1.msra.mxu0 %v549
  %647 = vmatprep.subr.mxu0 %v552
  %648 = vmatpush1.msra.mxu0 %v551
  %649 = vmatprep.subr.mxu0 %v554
  %650 = vmatpush1.msra.mxu0 %v553
  %651 = vmatprep.subr.mxu0 %v556
  %652 = vmatpush1.msra.mxu0 %v555
  %653 = vmatprep.subr.mxu0 %v558
  %654 = vmatpush1.msra.mxu0 %v557
  %655 = vmatprep.subr.mxu0 %v560
  %656 = vmatpush1.msra.mxu0 %v559
  %657 = vmatprep.subr.mxu0 %v562
  %658 = vmatpush1.msra.mxu0 %v561
  %659 = vmatprep.subr.mxu0 %v564
  %660 = vmatpush1.msra.mxu0 %v563
  %661 = vmatprep.subr.mxu0 %v566
  %662 = vmatpush1.msra.mxu0 %v565
  %663 = vmatprep.subr.mxu0 %v568
  %664 = vmatpush1.msra.mxu0 %v567
  %665 = vmatprep.subr.mxu0 %v570
  %666 = vmatpush1.msra.mxu0 %v569
  %667 = vmatprep.subr.mxu0 %v572
  %668 = vmatpush1.msra.mxu0 %v571
  %669 = vmatprep.subr.mxu0 %v574
  %670 = vmatpush1.msra.mxu0 %v573
  %671 = vmatprep.subr.mxu0 %v576
  %672 = vmatpush1.msra.mxu0 %v575
  %673 = vmatprep.subr.mxu0 %v578
  %674 = vmatpush1.msra.mxu0 %v577
  %675 = vmatprep.subr.mxu0 %v580
  %676 = vmatpush1.msra.mxu0 %v579
  %677 = vmatprep.subr.mxu0 %v582
  %678 = vmatpush1.msra.mxu0 %v581
  %679 = vmatprep.subr.mxu0 %v584
  %680 = vmatpush1.msra.mxu0 %v583
  %681 = vmatprep.subr.mxu0 %v586
  %682 = vmatpush1.msra.mxu0 %v585
  %683 = vmatprep.subr.mxu0 %v588
  %684 = vmatpush1.msra.mxu0 %v587
  %685 = vmatprep.subr.mxu0 %v590
  %686 = vmatpush1.msra.mxu0 %v589
  %687 = vmatprep.subr.mxu0 %v592
  %688 = vmatpush1.msra.mxu0 %v591
  %689 = vmatprep.subr.mxu0 %v594
  %690 = vmatpush1.msra.mxu0 %v593
  %691 = vmatprep.subr.mxu0 %v596
  %692 = vmatpush1.msra.mxu0 %v595
  %693 = vmatprep.subr.mxu0 %v598
  %694 = vmatpush1.msra.mxu0 %v597
  %695 = vmatprep.subr.mxu0 %v600
  %696 = vmatpush1.msra.mxu0 %v599
  %697 = vmatprep.subr.mxu0 %v602
  %698 = vmatpush1.msra.mxu0 %v601
  %699 = vmatprep.subr.mxu0 %v604
  %700 = vmatpush1.msra.mxu0 %v603
  %701 = vmatprep.subr.mxu0 %v606
  %702 = vmatpush1.msra.mxu0 %v605
  %703 = vmatprep.subr.mxu0 %v608
  %704 = vmatpush1.msra.mxu0 %v607
  %705 = vmatprep.mubr.f32.mxu0 %v207
  %706 = vmatmul.mubr.f32.gmra.mrb[0].mxu0 %v206
  %v707 = vpop.f32.mrb[0].mxu0
  %v708 = vadd.f32 0.0, %v707
  %v709 = vpop.f32.mrb[0].mxu0
  %v710 = vadd.f32 0.0, %v709
  %711 = vdwg.mxu0
  %712 = vmatprep.subr.mxu0 %v610
  %713 = vmatpush1.msra.mxu0 %v609
  %714 = vmatprep.subr.mxu0 %v612
  %715 = vmatpush1.msra.mxu0 %v611
  %716 = vmatprep.subr.mxu0 %v614
  %717 = vmatpush1.msra.mxu0 %v613
  %718 = vmatprep.subr.mxu0 %v616
  %719 = vmatpush1.msra.mxu0 %v615
  %720 = vmatprep.subr.mxu0 %v618
  %721 = vmatpush1.msra.mxu0 %v617
  %722 = vmatprep.subr.mxu0 %v620
  %723 = vmatpush1.msra.mxu0 %v619
  %724 = vmatprep.subr.mxu0 %v622
  %725 = vmatpush1.msra.mxu0 %v621
  %726 = vmatprep.subr.mxu0 %v624
  %727 = vmatpush1.msra.mxu0 %v623
  %728 = vmatprep.subr.mxu0 %v626
  %729 = vmatpush1.msra.mxu0 %v625
  %730 = vmatprep.subr.mxu0 %v628
  %731 = vmatpush1.msra.mxu0 %v627
  %732 = vmatprep.subr.mxu0 %v630
  %733 = vmatpush1.msra.mxu0 %v629
  %734 = vmatprep.subr.mxu0 %v632
  %735 = vmatpush1.msra.mxu0 %v631
  %736 = vmatprep.subr.mxu0 %v634
  %737 = vmatpush1.msra.mxu0 %v633
  %738 = vmatprep.subr.mxu0 %v636
  %739 = vmatpush1.msra.mxu0 %v635
  %740 = vmatprep.subr.mxu0 %v638
  %741 = vmatpush1.msra.mxu0 %v637
  %742 = vmatprep.subr.mxu0 %v640
  %743 = vmatpush1.msra.mxu0 %v639
  %744 = vmatprep.subr.mxu0 0.0
  %745 = vmatpush1.msra.mxu0 0.0
  %746 = vmatprep.subr.mxu0 0.0
  %747 = vmatpush1.msra.mxu0 0.0
  %748 = vmatprep.subr.mxu0 0.0
  %749 = vmatpush1.msra.mxu0 0.0
  %750 = vmatprep.subr.mxu0 0.0
  %751 = vmatpush1.msra.mxu0 0.0
  %752 = vmatprep.subr.mxu0 0.0
  %753 = vmatpush1.msra.mxu0 0.0
  %754 = vmatprep.subr.mxu0 0.0
  %755 = vmatpush1.msra.mxu0 0.0
  %756 = vmatprep.subr.mxu0 0.0
  %757 = vmatpush1.msra.mxu0 0.0
  %758 = vmatprep.subr.mxu0 0.0
  %759 = vmatpush1.msra.mxu0 0.0
  %760 = vmatprep.subr.mxu0 0.0
  %761 = vmatpush1.msra.mxu0 0.0
  %762 = vmatprep.subr.mxu0 0.0
  %763 = vmatpush1.msra.mxu0 0.0
  %764 = vmatprep.subr.mxu0 0.0
  %765 = vmatpush1.msra.mxu0 0.0
  %766 = vmatprep.subr.mxu0 0.0
  %767 = vmatpush1.msra.mxu0 0.0
  %768 = vmatprep.subr.mxu0 0.0
  %769 = vmatpush1.msra.mxu0 0.0
  %770 = vmatprep.subr.mxu0 0.0
  %771 = vmatpush1.msra.mxu0 0.0
  %772 = vmatprep.subr.mxu0 0.0
  %773 = vmatpush1.msra.mxu0 0.0
  %774 = vmatprep.subr.mxu0 0.0
  %775 = vmatpush1.msra.mxu0 0.0
  %776 = vmatprep.mubr.f32.mxu0 0.0
  %777 = vmatmul.mubr.f32.gmra.mrb[0].mxu0 %v208
  %v778 = vpop.f32.mrb[0].mxu0
  %v779 = vadd.f32 %v708, %v778
  %v780 = vpop.f32.mrb[0].mxu0
  %v781 = vadd.f32 %v710, %v780
  %782 = vdwg.mxu0
  %vm783 = vcmask 64512
  %v785 = vsel %vm783, %v489, 0
  %v788 = vsel %vm783, %v494, 0
  %790 = vmatprep.subr.mxu0 %v781
  %791 = vmatpush1.msra.mxu0 %v779
  %792 = vmatprep.subr.mxu0 0.0
  %793 = vmatpush1.msra.mxu0 0.0
  %794 = vmatprep.subr.mxu0 0.0
  %795 = vmatpush1.msra.mxu0 0.0
  %796 = vmatprep.subr.mxu0 0.0
  %797 = vmatpush1.msra.mxu0 0.0
  %798 = vmatprep.subr.mxu0 0.0
  %799 = vmatpush1.msra.mxu0 0.0
  %800 = vmatprep.subr.mxu0 0.0
  %801 = vmatpush1.msra.mxu0 0.0
  %802 = vmatprep.subr.mxu0 0.0
  %803 = vmatpush1.msra.mxu0 0.0
  %804 = vmatprep.subr.mxu0 0.0
  %805 = vmatpush1.msra.mxu0 0.0
  %806 = vmatprep.subr.mxu0 0.0
  %807 = vmatpush1.msra.mxu0 0.0
  %808 = vmatprep.subr.mxu0 0.0
  %809 = vmatpush1.msra.mxu0 0.0
  %810 = vmatprep.subr.mxu0 0.0
  %811 = vmatpush1.msra.mxu0 0.0
  %812 = vmatprep.subr.mxu0 0.0
  %813 = vmatpush1.msra.mxu0 0.0
  %814 = vmatprep.subr.mxu0 0.0
  %815 = vmatpush1.msra.mxu0 0.0
  %816 = vmatprep.subr.mxu0 0.0
  %817 = vmatpush1.msra.mxu0 0.0
  %818 = vmatprep.subr.mxu0 0.0
  %819 = vmatpush1.msra.mxu0 0.0
  %820 = vmatprep.subr.mxu0 0.0
  %821 = vmatpush1.msra.mxu0 0.0
  %822 = vmatprep.subr.mxu0 0.0
  %823 = vmatpush1.msra.mxu0 0.0
  %824 = vmatprep.subr.mxu0 0.0
  %825 = vmatpush1.msra.mxu0 0.0
  %826 = vmatprep.subr.mxu0 0.0
  %827 = vmatpush1.msra.mxu0 0.0
  %828 = vmatprep.subr.mxu0 0.0
  %829 = vmatpush1.msra.mxu0 0.0
  %830 = vmatprep.subr.mxu0 0.0
  %831 = vmatpush1.msra.mxu0 0.0
  %832 = vmatprep.subr.mxu0 0.0
  %833 = vmatpush1.msra.mxu0 0.0
  %834 = vmatprep.subr.mxu0 0.0
  %835 = vmatpush1.msra.mxu0 0.0
  %836 = vmatprep.subr.mxu0 0.0
  %837 = vmatpush1.msra.mxu0 0.0
  %838 = vmatprep.subr.mxu0 0.0
  %839 = vmatpush1.msra.mxu0 0.0
  %840 = vmatprep.subr.mxu0 0.0
  %841 = vmatpush1.msra.mxu0 0.0
  %842 = vmatprep.subr.mxu0 0.0
  %843 = vmatpush1.msra.mxu0 0.0
  %844 = vmatprep.subr.mxu0 0.0
  %845 = vmatpush1.msra.mxu0 0.0
  %846 = vmatprep.subr.mxu0 0.0
  %847 = vmatpush1.msra.mxu0 0.0
  %848 = vmatprep.subr.mxu0 0.0
  %849 = vmatpush1.msra.mxu0 0.0
  %850 = vmatprep.subr.mxu0 0.0
  %851 = vmatpush1.msra.mxu0 0.0
  %852 = vmatprep.subr.mxu0 0.0
  %853 = vmatpush1.msra.mxu0 0.0
  %854 = vmatprep.mubr.f32.mxu0 0.0
  %855 = vmatmul.mubr.f32.gmra.mrb[0].mxu0 %v785
  %v856 = vpop.f32.mrb[0].mxu0
  %v857 = vadd.f32 0.0, %v856
  %v858 = vpop.f32.mrb[0].mxu0
  %v859 = vadd.f32 0.0, %v858
  %860 = vmatprep.mubr.f32.mxu0 0.0
  %861 = vmatmul.mubr.f32.gmra.mrb[0].mxu0 %v788
  %v862 = vpop.f32.mrb[0].mxu0
  %v863 = vadd.f32 0.0, %v862
  %v864 = vpop.f32.mrb[0].mxu0
  %v865 = vadd.f32 0.0, %v864
  %866 = vdwg.mxu0
  %vm867 = vcmp.gt.f32.partialorder %v857, 0.0
  %vm868 = vcmp.gt.f32.partialorder %v859, 0.0
  %vm869 = vcmp.gt.f32.partialorder %v863, 0.0
  %vm870 = vcmp.gt.f32.partialorder %v865, 0.0
  %v871 = vmul.f32 %v857, 0.2
  %v872 = vmul.f32 %v859, 0.2
  %v873 = vmul.f32 %v863, 0.2
  %v874 = vmul.f32 %v865, 0.2
  %v875 = vsel %vm867, %v857, %v871
  %v876 = vsel %vm868, %v859, %v872
  %v877 = vsel %vm869, %v863, %v873
  %v878 = vsel %vm870, %v865, %v874
  %v879 = vmul.f32 %v875, %v875
  %v880 = vmul.f32 %v876, %v876
  %v881 = vadd.f32 %v875, %v877
  %v882 = vadd.f32 %v876, %v878
  %v883 = vmul.f32 %v877, %v877
  %v884 = vmul.f32 %v878, %v878
  %v885 = vadd.f32 %v879, %v883
  %v886 = vadd.f32 %v880, %v884
  %v887 = vadd.f32 %v881, %v882
  %888 = vadd.xlane.f32.xlu0 %v887
  %v889 = vpop.xlane.xlu0 %888
  %v890 = vmul.f32 %v889, 0.001953125
  %v891 = vadd.f32 %v885, %v886
  %892 = vadd.xlane.f32.xlu0 %v891
  %v893 = vpop.xlane.xlu0 %892
  %v894 = vmul.f32 %v893, 0.001953125
  %v895 = vmul.f32 %v890, %v890
  %v896 = vsub.f32 %v894, %v895
  %v897 = vadd.f32 %v896, 1e-05
  %v898 = vrsqrt.pop %v897
  %v899 = vmul.f32 %v60, %v898
  %v900 = vmul.f32 %v890, %v899
  %902 = vrot.lane.b32.xlu0 %v900, 1
  %v903 = vpop.permute.xlu0 %902
  %v905 = vsub.f32 %v60, %v903
  %907 = vset.pattern.permute.xlu0 0
  %908 = vperm.xlu0 %907, %v899
  %v909 = vpop.permute.xlu0 %908
  %v911 = vmul.f32 %v875, %v909
  %v912 = vmul.f32 %v876, %v909
  %914 = vset.pattern.permute.xlu0 1
  %915 = vperm.xlu0 %914, %v905
  %v916 = vpop.permute.xlu0 %915
  %v918 = vadd.f32 %v911, %v916
  %v919 = vadd.f32 %v912, %v916
  %920 = vst [vmem:[%s3] sm:$0xff] %v918
  %921 = vst [vmem:[%s3 + $0x8] sm:$0xff] %v919
  %v922 = vmul.f32 %v877, %v909
  %v923 = vmul.f32 %v878, %v909
  %v924 = vadd.f32 %v922, %v916
  %v925 = vadd.f32 %v923, %v916
  %926 = vst [vmem:[%s3 + $0x10] sm:$0xff] %v924
  %927 = vst [vmem:[%s3 + $0x18] sm:$0xff] %v925
  // Predicated region
  $region14: #{guided_convolution.1} parent=0 // pred_check
    _
  $region15: #{guided_convolution.1} parent=0 // pred_check_branch
    %929 = sbr.rel (0) target = $region17
  $region16: #{guided_convolution.1} parent=0 // pred_region
    _
  $region17: #{guided_convolution.1} parent=0 // pred_fallthru
    _
  // Predicated region
  $region18: #{guided_convolution.1} parent=0 // pred_check
    _
  $region19: #{guided_convolution.1} parent=0 // pred_check_branch
    %931 = sbr.rel (0) target = $region21
  $region20: #{guided_convolution.1} parent=0 // pred_region
    _
  $region21: #{guided_convolution.1} parent=0 // pred_fallthru
    _

</llo_original>
